<compile_context>
chip_gen: v6e
topology: v6e:2x2x1
jax: 0.10.0
libtpu: 0.0.40
codegen_flags: <defaults>
</compile_context>

<pallas_src>
import functools

import jax
import jax.numpy as jnp
from jax.experimental import pallas as pl
from jax.experimental.pallas import tpu as pltpu

_LANE = 128
_MIB = 1024 * 1024


def _round_up(v: int, m: int) -> int:
    return ((v + m - 1) // m) * m


def _cdiv(a: int, b: int) -> int:
    return (a + b - 1) // b


# --------------------------------------------------------------------------- #
# Kernels
# --------------------------------------------------------------------------- #
def _linear_kernel_nok(x_ref, w_ref, b_ref, o_ref):
    """Single-K-tile path: whole reduction in one MXU call, bias fused."""
    o_ref[...] = (
        jnp.dot(x_ref[...], w_ref[...], preferred_element_type=jnp.float32)
        + b_ref[...].astype(jnp.float32)
    ).astype(o_ref.dtype)


def _linear_kernel_ktiled(x_ref, w_ref, b_ref, o_ref, acc_ref):
    """K-tiled path: grid axis 2 is the reduction, f32 VMEM accumulator."""
    k = pl.program_id(2)

    @pl.when(k == 0)
    def _init():
        acc_ref[...] = jnp.zeros_like(acc_ref)

    acc_ref[...] += jnp.dot(
        x_ref[...], w_ref[...], preferred_element_type=jnp.float32
    )

    @pl.when(k == pl.num_programs(2) - 1)
    def _finalize():
        # Bias add lives in the otherwise-idle finalize step, off the MXU path.
        o_ref[...] = (acc_ref[...] + b_ref[...].astype(jnp.float32)).astype(
            o_ref.dtype
        )


# --------------------------------------------------------------------------- #
# Jitted forward (weight/bias arrive pre-transposed + pre-padded from setup)
# --------------------------------------------------------------------------- #
@functools.partial(
    jax.jit, static_argnames=("tm", "tn", "tk", "k_tiled", "n_out", "vmem_limit")
)
def _linear_forward(x, w_p, b_p, *, tm, tn, tk, k_tiled, n_out, vmem_limit):
    B, Cin = x.shape
    Kp, Np = w_p.shape
    Bp = _round_up(B, tm)
    if (Bp, Kp) != (B, Cin):
        # Zero padding along K contributes nothing to the reduction.
        x = jnp.pad(x, ((0, Bp - B), (0, Kp - Cin)))

    Mt, Nt = Bp // tm, Np // tn
    isz_x = x.dtype.itemsize
    isz_w = w_p.dtype.itemsize
    out_dtype = x.dtype

    if not k_tiled:
        # Grid (Nt, Mt): N outermost -> the W column-block index (0, j) only
        # changes on the outer axis, so the weight is read from HBM exactly
        # once (fully resident when Nt == 1). X streams once per N tile.
        out = pl.pallas_call(
            _linear_kernel_nok,
            out_shape=jax.ShapeDtypeStruct((Bp, Np), out_dtype),
            grid_spec=pltpu.PrefetchScalarGridSpec(
                num_scalar_prefetch=0,
                grid=(Nt, Mt),
                in_specs=[
                    pl.BlockSpec((tm, Kp), lambda j, i: (i, 0)),  # X row block
                    pl.BlockSpec((Kp, tn), lambda j, i: (0, j)),  # W (resident)
                    pl.BlockSpec((1, tn), lambda j, i: (0, j)),   # bias
                ],
                out_specs=pl.BlockSpec((tm, tn), lambda j, i: (i, j)),
            ),
            compiler_params=pltpu.CompilerParams(
                dimension_semantics=("parallel", "parallel"),
                vmem_limit_bytes=vmem_limit,
            ),
            cost_estimate=pl.CostEstimate(
                flops=2 * Bp * Kp * Np,
                transcendentals=0,
                bytes_accessed=(
                    Nt * Bp * Kp * isz_x          # X streamed once per N tile
                    + Kp * Np * isz_w             # W read exactly once
                    + Np * b_p.dtype.itemsize
                    + Bp * Np * out_dtype.itemsize
                ),
            ),
        )(x, w_p, b_p)
    else:
        Kt = Kp // tk
        out = pl.pallas_call(
            _linear_kernel_ktiled,
            out_shape=jax.ShapeDtypeStruct((Bp, Np), out_dtype),
            grid_spec=pltpu.PrefetchScalarGridSpec(
                num_scalar_prefetch=0,
                grid=(Mt, Nt, Kt),
                in_specs=[
                    pl.BlockSpec((tm, tk), lambda i, j, k: (i, k)),  # X tile
                    pl.BlockSpec((tk, tn), lambda i, j, k: (k, j)),  # W^T tile
                    pl.BlockSpec((1, tn), lambda i, j, k: (0, j)),   # bias (resident in k)
                ],
                out_specs=pl.BlockSpec((tm, tn), lambda i, j, k: (i, j)),
                scratch_shapes=[pltpu.VMEM((tm, tn), jnp.float32)],
            ),
            compiler_params=pltpu.CompilerParams(
                dimension_semantics=("parallel", "parallel", "arbitrary"),
                vmem_limit_bytes=vmem_limit,
            ),
            cost_estimate=pl.CostEstimate(
                flops=2 * Bp * Kp * Np,
                transcendentals=0,
                bytes_accessed=(
                    Nt * Bp * Kp * isz_x          # X re-streamed once per N tile
                    + Mt * Kp * Np * isz_w        # W re-streamed once per M tile
                    + Mt * Np * b_p.dtype.itemsize
                    + Bp * Np * out_dtype.itemsize
                ),
            ),
        )(x, w_p, b_p)

    return out[:B, :n_out]


# --------------------------------------------------------------------------- #
# Setup-time wrapper (mirrors torch LinearBlock)
# --------------------------------------------------------------------------- #
class LinearBlockPallas:
    """y = x @ W^T + b, equivalent to torch nn.Linear(in_channel, n_classes)."""

    # Per-buffer caps so the worst-case double-buffered footprint stays around
    # ~25 MiB: inside v7x's 32 MiB scoped / 64 MiB physical VMEM, trivially
    # inside v5e/v6e's 128 MiB.
    _W_RESIDENT_BYTES = 4 * _MIB   # one W block (per buffer)
    _X_BLOCK_BYTES = 4 * _MIB      # one X block (per buffer)
    _TM_TARGET = 512
    _TN_MAX = 2048
    _TK_TARGET = 2048

    def __init__(self, weight, bias):
        weight = jnp.asarray(weight)          # (n_classes, in_channel), torch layout
        bias = jnp.asarray(bias)              # (n_classes,)
        n_classes, in_channel = weight.shape
        isz = jnp.dtype(weight.dtype).itemsize
        self.n_classes = int(n_classes)
        self.in_channel = int(in_channel)

        Kp = _round_up(self.in_channel, _LANE)
        Np0 = _round_up(self.n_classes, _LANE)    # lane-dense output (>=128 wide)

        # Largest K that keeps a (tm=512, K) X block within budget -> whole
        # reduction fits one MXU tile (no K grid axis, no accumulator).
        k_single_max = max(
            _LANE,
            (self._X_BLOCK_BYTES // (self._TM_TARGET * isz)) // _LANE * _LANE,
        )
        self.k_tiled = Kp > k_single_max

        if not self.k_tiled:
            self.tk = Kp
            if Kp * Np0 * isz <= self._W_RESIDENT_BYTES:
                tn = min(Np0, self._TN_MAX)       # whole weight VMEM-resident
            else:
                tn = max(_LANE,
                         (self._W_RESIDENT_BYTES // (Kp * isz)) // _LANE * _LANE)
                tn = min(tn, self._TN_MAX)
            Nt = _cdiv(Np0, tn)
            tn = _round_up(_cdiv(Np0, Nt), _LANE)
            Np = tn * Nt
        else:
            Kt = _cdiv(Kp, self._TK_TARGET)
            self.tk = _round_up(_cdiv(Kp, Kt), _LANE)
            Kp = self.tk * Kt
            tn = min(Np0, 256)
            Nt = _cdiv(Np0, tn)
            tn = _round_up(_cdiv(Np0, Nt), _LANE)
            Np = tn * Nt

        self.Kp, self.Np, self.tn, self.Nt = Kp, Np, tn, Nt

        # One-off parameter prep: transpose + zero-pad at setup time so the
        # jitted forward never re-pads (or re-copies) the weight per call.
        w_t = weight.T                                        # (Cin, n_classes)
        self.w_p = jnp.pad(
            w_t, ((0, Kp - self.in_channel), (0, Np - self.n_classes))
        )
        self.b_p = jnp.pad(
            bias.reshape(1, -1), ((0, 0), (0, Np - self.n_classes))
        )

    def __call__(self, x):
        B = int(x.shape[0])
        isz = jnp.dtype(x.dtype).itemsize
        sub = 16 if isz < 4 else 8            # bf16 rows pack in sublane pairs
        Bp0 = _round_up(max(B, 1), sub)
        Mt = _cdiv(Bp0, self._TM_TARGET)
        # v7x megacore: keep >= 2 output tiles so both TensorCores get work.
        if Mt == 1 and self.Nt == 1 and Bp0 >= 2 * sub:
            Mt = 2
        tm = _round_up(_cdiv(Bp0, Mt), sub)

        # Double-buffered VMEM footprint of this plan (+ margin), clamped to a
        # range that is safe on every generation (v5e scoped default is 16 MiB,
        # v7x physical is 64 MiB).
        blocks = tm * self.tk + self.tk * self.tn + self.tn + tm * self.tn
        footprint = 2 * isz * blocks
        if self.k_tiled:
            footprint += 4 * tm * self.tn     # f32 accumulator scratch
        vmem_limit = int(min(56 * _MIB, max(32 * _MIB, footprint + 8 * _MIB)))

        return _linear_forward(
            x, self.w_p, self.b_p,
            tm=tm, tn=self.tn, tk=self.tk, k_tiled=self.k_tiled,
            n_out=self.n_classes, vmem_limit=vmem_limit,
        )


if __name__ == "__main__":
    # ---- Small test at the module's natural toy shape ----------------------
    in_channel, n_classes, batch = 32, 16, 8
    key = jax.random.PRNGKey(0)
    kx, kw, kb = jax.random.split(key, 3)

    bound = 1.0 / float(jnp.sqrt(in_channel))
    # PyTorch nn.Linear stores weight as (n_classes, in_channel).
    weight = jax.random.uniform(
        kw, (n_classes, in_channel), jnp.float32, -bound, bound
    )
    bias = jax.random.uniform(kb, (n_classes,), jnp.float32, -bound, bound)
    x = jax.random.normal(kx, (batch, in_channel), jnp.float32)

    block = LinearBlockPallas(weight, bias)   # params transposed/padded ONCE here
    out = jax.block_until_ready(block(x))
    ref = x @ weight.T + bias
    assert out.shape == (batch, n_classes)
    assert jnp.allclose(out, ref, atol=1e-4, rtol=1e-4), float(
        jnp.max(jnp.abs(out - ref))
    )

    # ---- Larger test: exercises the K-tiled accumulator path, multi-tile ----
    # grid and edge padding / slicing.
    kx2, kw2, kb2 = jax.random.split(jax.random.PRNGKey(1), 3)
    B2, C2, N2 = 280, 2304, 300      # C2 exceeds the single-K-tile limit
    x2 = jax.random.normal(kx2, (B2, C2), jnp.float32)
    w2 = jax.random.uniform(kw2, (N2, C2), jnp.float32, -0.05, 0.05)
    b2 = jax.random.uniform(kb2, (N2,), jnp.float32, -0.05, 0.05)

    block2 = LinearBlockPallas(w2, b2)
    assert block2.k_tiled
    out2 = jax.block_until_ready(block2(x2))
    ref2 = jnp.dot(x2, w2.T, precision=jax.lax.Precision.HIGHEST) + b2
    assert out2.shape == (B2, N2)
    assert jnp.allclose(out2, ref2, atol=2e-2, rtol=2e-2), float(
        jnp.max(jnp.abs(out2 - ref2))
    )

    print("KERNEL_OK")
</pallas_src>

<mosaic_0001>
module attributes {stable_mosaic.version = 11 : i64} {
  func.func @_linear_kernel_nok(%arg0: i32, %arg1: i32, %arg2: memref<8x128xf32, #tpu.memory_space<vmem>>, %arg3: memref<128x128xf32, #tpu.memory_space<vmem>>, %arg4: memref<1x128xf32, #tpu.memory_space<vmem>>, %arg5: memref<8x128xf32, #tpu.memory_space<vmem>>) attributes {dimension_semantics = [#tpu.dimension_semantics<parallel>, #tpu.dimension_semantics<parallel>], iteration_bounds = array<i64: 1, 1>, scalar_prefetch = 0 : i64, scratch_operands = 0 : i64, tpu.core_type = #tpu.core_type<tc>, window_params = [{transform_indices = @transform_0, window_bounds = array<i64: 8, 128>}, {transform_indices = @transform_1, window_bounds = array<i64: 128, 128>}, {transform_indices = @transform_2, window_bounds = array<i64: 1, 128>}, {transform_indices = @transform_3, window_bounds = array<i64: 8, 128>}]} {
    %c0 = arith.constant 0 : index
    %c0_0 = arith.constant 0 : index
    %0 = vector.load %arg2[%c0, %c0_0] : memref<8x128xf32, #tpu.memory_space<vmem>>, vector<8x128xf32>
    %c0_1 = arith.constant 0 : index
    %c0_2 = arith.constant 0 : index
    %1 = vector.load %arg3[%c0_1, %c0_2] : memref<128x128xf32, #tpu.memory_space<vmem>>, vector<128x128xf32>
    %cst = arith.constant dense<0.000000e+00> : vector<8x128xf32>
    %2 = tpu.matmul %0, %1, %cst {dimension_numbers = #tpu.dot_dimension_numbers<[1], [0], [0], [1], [0, 0, 1, 1], [], []>} : vector<8x128xf32>, vector<128x128xf32>, vector<8x128xf32> -> vector<8x128xf32>
    %c0_3 = arith.constant 0 : index
    %c0_4 = arith.constant 0 : index
    %3 = vector.load %arg4[%c0_3, %c0_4] : memref<1x128xf32, #tpu.memory_space<vmem>>, vector<1x128xf32>
    %4 = vector.broadcast %3 : vector<1x128xf32> to vector<8x128xf32>
    %5 = arith.addf %2, %4 : vector<8x128xf32>
    %c0_5 = arith.constant 0 : index
    %c0_6 = arith.constant 0 : index
    %6 = vector.load %arg5[%c0_5, %c0_6] : memref<8x128xf32, #tpu.memory_space<vmem>>, vector<8x128xf32>
    tpu.vector_store %arg5[%c0_5, %c0_6], %5 {strides = array<i32>} : memref<8x128xf32, #tpu.memory_space<vmem>>, vector<8x128xf32>,
    return
  }
  func.func @transform_0(%arg0: i32, %arg1: i32) -> (i32, i32) {
    %c0_i32 = arith.constant 0 : i32
    %c0_i32_0 = arith.constant 0 : i32
    return %arg1, %c0_i32 : i32, i32
  }
  func.func @transform_1(%arg0: i32, %arg1: i32) -> (i32, i32) {
    %c0_i32 = arith.constant 0 : i32
    %c0_i32_0 = arith.constant 0 : i32
    return %c0_i32, %arg0 : i32, i32
  }
  func.func @transform_2(%arg0: i32, %arg1: i32) -> (i32, i32) {
    %c0_i32 = arith.constant 0 : i32
    %c0_i32_0 = arith.constant 0 : i32
    return %c0_i32, %arg0 : i32, i32
  }
  func.func @transform_3(%arg0: i32, %arg1: i32) -> (i32, i32) {
    %c0_i32 = arith.constant 0 : i32
    return %arg1, %arg0 : i32, i32
  }
}

</mosaic_0001>

<llo_original>
// kernel: _linear_forward.1
$region0: #{_linear_forward.1}
  #allocation0 [shape = 'u32[]', space=smem, size = 0x4, offset = 0x4, fixed_abs, tag = 'smem constant byte address 0x4 - core index']
  #allocation1 [shape = 'u32[144,128]{1,0:T(1,128)}', space=vmem, size = 0x12000, scoped, tag = 'internal scratch']
  %s0 = inlined_call_operand.vmem [shape: f32[8,128], index: 0, kind: input, shape index: {}]
  %s1 = inlined_call_operand.hbm [shape: f32[128,128], index: 1, kind: input, shape index: {}]
  %s2 = inlined_call_operand.vmem [shape: f32[1,128], index: 2, kind: input, shape index: {}]
  %s3 = inlined_call_operand.hbm [shape: f32[8,128], index: 3, kind: output, shape index: {}]
  %s4 = sld [smem:[#allocation0]]
  $region26: #{_linear_forward.1} parent=0
    _
  %s6 = ssub.s32 1, %s4
  %s7 = scalar_select 0, %s6, %s4
  $region1: #{_linear_forward.1} parent=0
    #allocation2 [shape = 'u8[65536]{0}', space=vmem, size = 0x10000, scoped, tag = 'input window, operand 1, single buffered']
    #allocation3 [shape = 's32[1]{0}', space=sflag, size = 0x4, scoped, tag = 'scoped memory for _linear_forward.1']
    #allocation4 [shape = 's32[1]{0}', space=sflag, size = 0x4, scoped, tag = 'scoped memory for _linear_forward.1']
    #allocation5 [shape = 'u8[4096]{0}', space=vmem, size = 0x1000, scoped, tag = 'output window, operand 0, single buffered']
    %8 = vsyncpa [#allocation3], 0
    %9 = vsyncpa [#allocation4], 0
    // Predicated region
    $region2: #{_linear_forward.1} parent=1 // pred_check
      _
    $region3: #{_linear_forward.1} parent=1 // pred_check_branch
      %11 = sbr.rel (0) target = $region5
    $region4: #{_linear_forward.1} parent=1 // pred_region
      _
    $region5: #{_linear_forward.1} parent=1 // pred_fallthru
      _
    // Predicated region
    $region6: #{_linear_forward.1} parent=1 // pred_check
      _
    $region7: #{_linear_forward.1} parent=1 // pred_check_branch
      %13 = sbr.rel (0) target = $region9
    $region8: #{_linear_forward.1} parent=1 // pred_region
      %s15 = ssub.s32 2048, 2048
      %16 = vsyncadd [#allocation3], %s15
      %s17 = sshll.u32 [#allocation2], 4
      %s18 = int_to_ptr.vmem [resolvable:$true] %s17
      %23 = dma.hbm_to_vmem [thread:$0]  %s1, 2048, %s18, [#allocation3], 128, 128, 8
    $region9: #{_linear_forward.1} parent=1 // pred_fallthru
      _
    // Predicated region
    $region10: #{_linear_forward.1} parent=1 // pred_check
      _
    $region11: #{_linear_forward.1} parent=1 // pred_check_branch
      %25 = sbr.rel (0) target = $region13
    $region12: #{_linear_forward.1} parent=1 // pred_region
      _
    $region13: #{_linear_forward.1} parent=1 // pred_fallthru
      _
    // Predicated region
    $region14: #{_linear_forward.1} parent=1 // pred_check
      _
    $region15: #{_linear_forward.1} parent=1 // pred_check_branch
      %27 = sbr.rel (0) target = $region17
    $region16: #{_linear_forward.1} parent=1 // pred_region
      %28 = dma.done [#allocation3], 2048
    $region17: #{_linear_forward.1} parent=1 // pred_fallthru
      _
    %v29 = vld [vmem:[%s0] sm:$0xff]
    %v30 = vld [vmem:[#allocation2] sm:$0xff]
    %v31 = vld [vmem:[#allocation2 + $0x8] sm:$0xff]
    %v32 = vld [vmem:[#allocation2 + $0x10] sm:$0xff]
    %v33 = vld [vmem:[#allocation2 + $0x18] sm:$0xff]
    %v34 = vld [vmem:[#allocation2 + $0x20] sm:$0xff]
    %v35 = vld [vmem:[#allocation2 + $0x28] sm:$0xff]
    %v36 = vld [vmem:[#allocation2 + $0x30] sm:$0xff]
    %v37 = vld [vmem:[#allocation2 + $0x38] sm:$0xff]
    %v38 = vld [vmem:[#allocation2 + $0x40] sm:$0xff]
    %v39 = vld [vmem:[#allocation2 + $0x48] sm:$0xff]
    %v40 = vld [vmem:[#allocation2 + $0x50] sm:$0xff]
    %v41 = vld [vmem:[#allocation2 + $0x58] sm:$0xff]
    %v42 = vld [vmem:[#allocation2 + $0x60] sm:$0xff]
    %v43 = vld [vmem:[#allocation2 + $0x68] sm:$0xff]
    %v44 = vld [vmem:[#allocation2 + $0x70] sm:$0xff]
    %v45 = vld [vmem:[#allocation2 + $0x78] sm:$0xff]
    %v46 = vld [vmem:[%s2] sm:$0x1]
    %v48 = vlaneseq
    %v49 = vshrl.u32 %v48, 7
    %v50 = vsub.s32 0, %v49
    %v51 = vrot.slane %v46, %v50
    %53 = vmatprep.subr.mxu0 0.0
    %54 = vmatpush1.msra.mxu0 %v45
    %55 = vmatprep.subr.mxu0 0.0
    %56 = vmatpush1.msra.mxu0 %v44
    %57 = vmatprep.subr.mxu0 0.0
    %58 = vmatpush1.msra.mxu0 %v43
    %59 = vmatprep.subr.mxu0 0.0
    %60 = vmatpush1.msra.mxu0 %v42
    %61 = vmatprep.subr.mxu0 0.0
    %62 = vmatpush1.msra.mxu0 %v41
    %63 = vmatprep.subr.mxu0 0.0
    %64 = vmatpush1.msra.mxu0 %v40
    %65 = vmatprep.subr.mxu0 0.0
    %66 = vmatpush1.msra.mxu0 %v39
    %67 = vmatprep.subr.mxu0 0.0
    %68 = vmatpush1.msra.mxu0 %v38
    %69 = vmatprep.subr.mxu0 0.0
    %70 = vmatpush1.msra.mxu0 %v37
    %71 = vmatprep.subr.mxu0 0.0
    %72 = vmatpush1.msra.mxu0 %v36
    %73 = vmatprep.subr.mxu0 0.0
    %74 = vmatpush1.msra.mxu0 %v35
    %75 = vmatprep.subr.mxu0 0.0
    %76 = vmatpush1.msra.mxu0 %v34
    %77 = vmatprep.subr.mxu0 0.0
    %78 = vmatpush1.msra.mxu0 %v33
    %79 = vmatprep.subr.mxu0 0.0
    %80 = vmatpush1.msra.mxu0 %v32
    %81 = vmatprep.subr.mxu0 0.0
    %82 = vmatpush1.msra.mxu0 %v31
    %83 = vmatprep.subr.mxu0 0.0
    %84 = vmatpush1.msra.mxu0 %v30
    %85 = vmatprep.subr.mxu0 0.0
    %86 = vmatpush2.msra.mxu0 0.0
    %87 = vmatprep.subr.mxu0 0.0
    %88 = vmatpush2.msra.mxu0 0.0
    %89 = vmatprep.subr.mxu0 0.0
    %90 = vmatpush2.msra.mxu0 0.0
    %91 = vmatprep.subr.mxu0 0.0
    %92 = vmatpush2.msra.mxu0 0.0
    %93 = vmatprep.subr.mxu0 0.0
    %94 = vmatpush2.msra.mxu0 0.0
    %95 = vmatprep.subr.mxu0 0.0
    %96 = vmatpush2.msra.mxu0 0.0
    %97 = vmatprep.subr.mxu0 0.0
    %98 = vmatpush2.msra.mxu0 0.0
    %99 = vmatprep.subr.mxu0 0.0
    %100 = vmatpush2.msra.mxu0 0.0
    %101 = vmatprep.subr.mxu0 0.0
    %102 = vmatpush2.msra.mxu0 0.0
    %103 = vmatprep.subr.mxu0 0.0
    %104 = vmatpush2.msra.mxu0 0.0
    %105 = vmatprep.subr.mxu0 0.0
    %106 = vmatpush2.msra.mxu0 0.0
    %107 = vmatprep.subr.mxu0 0.0
    %108 = vmatpush2.msra.mxu0 0.0
    %109 = vmatprep.subr.mxu0 0.0
    %110 = vmatpush2.msra.mxu0 0.0
    %111 = vmatprep.subr.mxu0 0.0
    %112 = vmatpush2.msra.mxu0 0.0
    %113 = vmatprep.subr.mxu0 0.0
    %114 = vmatpush2.msra.mxu0 0.0
    %115 = vmatprep.subr.mxu0 0.0
    %116 = vmatpush2.msra.mxu0 0.0
    %117 = vmatprep.mubr.f32.mxu0 0.0
    %118 = vmatmul.mubr.f32.gmra.mxu0 %v29
    %v119 = vpop.f32.mrf.mxu0
    %v120 = vadd.f32 %v51, %v119
    %v121 = vpop.f32.mrf.mxu0
    %122 = vdwg.mxu0
    %123 = vst [vmem:[#allocation5] sm:$0xff] %v120
    // Predicated region
    $region18: #{_linear_forward.1} parent=1 // pred_check
      _
    $region19: #{_linear_forward.1} parent=1 // pred_check_branch
      %125 = sbr.rel (0) target = $region21
    $region20: #{_linear_forward.1} parent=1 // pred_region
      %s127 = ssub.s32 128, 128
      %128 = vsyncadd [#allocation4], %s127
      %s130 = sshll.u32 [#allocation5], 4
      %s131 = int_to_ptr.vmem [resolvable:$true] %s130
      %133 = dma.vmem_to_hbm [thread:$0]  %s131, 128, %s3, [#allocation4]
    $region21: #{_linear_forward.1} parent=1 // pred_fallthru
      _
    // Predicated region
    $region22: #{_linear_forward.1} parent=1 // pred_check
      _
    $region23: #{_linear_forward.1} parent=1 // pred_check_branch
      %135 = sbr.rel (0) target = $region25
    $region24: #{_linear_forward.1} parent=1 // pred_region
      %136 = dma.done [#allocation4], 128
    $region25: #{_linear_forward.1} parent=1 // pred_fallthru
      _
    %137 = vsyncpa [#allocation3], 1
    %138 = vsyncpa [#allocation4], 1

</llo_original>
